<compile_context>
chip_gen: v6e
topology: v6e:2x2x1
jax: 0.10.0
libtpu: 0.0.40
codegen_flags: <defaults>
</compile_context>

<pallas_src>
import jax
import jax.numpy as jnp
from jax.experimental import pallas as pl
from jax.experimental.pallas import tpu as pltpu

LANE = 128
SUBLANE = 8
_MIN_GRID_STEPS = 8              # >= 4 steps per TensorCore on v7x (2 TCs)
_MIN_BLOCK_BYTES = 512 * 1024    # roofline knee for tiled elementwise ops


def _hw_block_params():
    """Per-generation (target_block_bytes, vmem_limit_bytes)."""
    try:
        vmem_cap = pltpu.get_tpu_info().vmem_capacity_bytes
    except Exception:
        vmem_cap = 128 * 1024 * 1024
    if vmem_cap <= 64 * 1024 * 1024:               # v7x-class: 64 MiB VMEM per TC
        return 4 * 1024 * 1024, 32 * 1024 * 1024
    return 8 * 1024 * 1024, 48 * 1024 * 1024       # v5e / v6e: 128 MiB VMEM


def _swish_kernel(x_ref, o_ref):
    x = x_ref[...].astype(jnp.float32)
    # sigmoid(x) = 0.5 * (tanh(x/2) + 1): one EUP transcendental per element
    # (instead of exp + divide); the surrounding mul/adds are cheap VPU ops
    # that co-issue with loads/stores.
    sig = 0.5 * (jnp.tanh(0.5 * x) + 1.0)
    o_ref[...] = (x * sig).astype(o_ref.dtype)


def _round_up(v, m):
    return ((v + m - 1) // m) * m


def _swish_2d(x2d, block_rows, vmem_limit):
    rows, cols = x2d.shape
    n = rows * cols
    itemsize = jnp.dtype(x2d.dtype).itemsize
    grid = (pl.cdiv(rows, block_rows),)
    return pl.pallas_call(
        _swish_kernel,
        out_shape=jax.ShapeDtypeStruct((rows, cols), x2d.dtype),
        grid_spec=pltpu.PrefetchScalarGridSpec(
            num_scalar_prefetch=0,
            grid=grid,
            in_specs=[pl.BlockSpec((block_rows, cols), lambda i: (i, 0))],
            out_specs=pl.BlockSpec((block_rows, cols), lambda i: (i, 0)),
        ),
        compiler_params=pltpu.CompilerParams(
            dimension_semantics=("parallel",),
            vmem_limit_bytes=vmem_limit,
        ),
        cost_estimate=pl.CostEstimate(
            flops=int(4 * n),
            transcendentals=int(n),
            bytes_accessed=int(2 * n * itemsize),
        ),
    )(x2d)


def swish(x: jax.Array) -> jax.Array:
    """Elementwise x * sigmoid(x).

    The PyTorch `inplace` flag is a no-op under JAX's functional semantics.
    """
    orig_shape = x.shape
    n = x.size
    if n == 0:
        return x
    itemsize = jnp.dtype(x.dtype).itemsize

    x_flat = jnp.ravel(x)
    n_main = (n // LANE) * LANE      # 128-aligned prefix handled by the kernel
    tail = n - n_main

    if n_main == 0:
        # Whole tensor smaller than one lane row: plain XLA.
        xf = x.astype(jnp.float32)
        return (xf * jax.nn.sigmoid(xf)).astype(x.dtype).reshape(orig_shape)

    target_block_bytes, vmem_limit = _hw_block_params()
    cols = LANE
    rows = n_main // cols

    # Block rows sized in bytes (bf16 automatically gets 2x the rows) ...
    block_rows = target_block_bytes // (cols * itemsize)
    block_rows = max(SUBLANE, (block_rows // SUBLANE) * SUBLANE)
    # ... but capped so large tensors always get >= _MIN_GRID_STEPS pipelined
    # grid steps (and an even split across v7x's 2 TensorCores), while never
    # shrinking a block below the HBM-roofline knee.
    min_block_rows = max(SUBLANE,
                         (_MIN_BLOCK_BYTES // (cols * itemsize) // SUBLANE) * SUBLANE)
    cap = max(min_block_rows, _round_up(pl.cdiv(rows, _MIN_GRID_STEPS), SUBLANE))
    block_rows = min(block_rows, cap)
    if block_rows >= rows:
        block_rows = rows            # single full-extent block (small tensors)

    x_main = (x_flat[:n_main] if tail else x_flat).reshape(rows, cols)
    out_main = _swish_2d(x_main, block_rows, vmem_limit).reshape(-1)

    if tail:
        # <128-element remainder: one tiny XLA op instead of full-tensor
        # pad + slice HBM round trips.
        xt = x_flat[n_main:].astype(jnp.float32)
        out_tail = (xt * jax.nn.sigmoid(xt)).astype(x.dtype)
        return jnp.concatenate([out_main, out_tail]).reshape(orig_shape)
    return out_main.reshape(orig_shape)


if __name__ == "__main__":
    key = jax.random.PRNGKey(0)
    x = jax.random.normal(key, (2, 4, 16, 16), dtype=jnp.float32)  # NCHW

    y = jax.block_until_ready(swish(x))
    y_ref = x * jax.nn.sigmoid(x)
    assert y.shape == x.shape and y.dtype == x.dtype
    assert jnp.allclose(y, y_ref, atol=1e-5, rtol=1e-5)

    # Ragged size: 128-aligned prefix through the kernel + XLA tail epilogue.
    x2 = jax.random.normal(jax.random.PRNGKey(1), (2, 3, 67), dtype=jnp.float32)
    y2 = jax.block_until_ready(swish(x2))
    assert jnp.allclose(y2, x2 * jax.nn.sigmoid(x2), atol=1e-5, rtol=1e-5)

    # Sub-128-element tensor: pure XLA fallback path.
    x3 = jax.random.normal(jax.random.PRNGKey(2), (3, 5, 7), dtype=jnp.float32)
    y3 = jax.block_until_ready(swish(x3))
    assert jnp.allclose(y3, x3 * jax.nn.sigmoid(x3), atol=1e-5, rtol=1e-5)

    # ~1 MiB tensor: exercises the multi-step pipelined grid.
    x4 = jax.random.normal(jax.random.PRNGKey(3), (8, 32, 32, 32), dtype=jnp.float32)
    y4 = jax.block_until_ready(swish(x4))
    assert jnp.allclose(y4, x4 * jax.nn.sigmoid(x4), atol=1e-5, rtol=1e-5)

    # bf16: computed in f32 inside the kernel, rounded back once.
    x5 = jax.random.normal(jax.random.PRNGKey(4), (2, 4, 16, 16), dtype=jnp.bfloat16)
    y5 = jax.block_until_ready(swish(x5))
    ref5 = (x5.astype(jnp.float32) * jax.nn.sigmoid(x5.astype(jnp.float32)))
    assert y5.dtype == jnp.bfloat16
    assert jnp.allclose(y5.astype(jnp.float32), ref5, atol=1e-2, rtol=1e-2)

    print("KERNEL_OK")
</pallas_src>

<mosaic_0001>
module attributes {stable_mosaic.version = 11 : i64} {
  func.func @_swish_kernel(%arg0: i32, %arg1: memref<16x128xf32, #tpu.memory_space<vmem>>, %arg2: memref<16x128xf32, #tpu.memory_space<vmem>>) attributes {dimension_semantics = [#tpu.dimension_semantics<parallel>], iteration_bounds = array<i64: 1>, scalar_prefetch = 0 : i64, scratch_operands = 0 : i64, tpu.core_type = #tpu.core_type<tc>, window_params = [{transform_indices = @transform_0, window_bounds = array<i64: 16, 128>}, {transform_indices = @transform_1, window_bounds = array<i64: 16, 128>}]} {
    %c0 = arith.constant 0 : index
    %c0_0 = arith.constant 0 : index
    %0 = vector.load %arg1[%c0, %c0_0] : memref<16x128xf32, #tpu.memory_space<vmem>>, vector<16x128xf32>
    %cst = arith.constant 5.000000e-01 : f32
    %1 = vector.broadcast %cst : f32 to vector<16x128xf32>
    %2 = arith.mulf %1, %0 : vector<16x128xf32>
    %3 = math.tanh %2 : vector<16x128xf32>
    %cst_1 = arith.constant 1.000000e+00 : f32
    %4 = vector.broadcast %cst_1 : f32 to vector<16x128xf32>
    %5 = arith.addf %3, %4 : vector<16x128xf32>
    %cst_2 = arith.constant 5.000000e-01 : f32
    %6 = vector.broadcast %cst_2 : f32 to vector<16x128xf32>
    %7 = arith.mulf %6, %5 : vector<16x128xf32>
    %8 = arith.mulf %0, %7 : vector<16x128xf32>
    %c0_3 = arith.constant 0 : index
    %c0_4 = arith.constant 0 : index
    %9 = vector.load %arg2[%c0_3, %c0_4] : memref<16x128xf32, #tpu.memory_space<vmem>>, vector<16x128xf32>
    tpu.vector_store %arg2[%c0_3, %c0_4], %8 {strides = array<i32>} : memref<16x128xf32, #tpu.memory_space<vmem>>, vector<16x128xf32>,
    return
  }
  func.func @transform_0(%arg0: i32) -> (i32, i32) {
    %c0_i32 = arith.constant 0 : i32
    %c0_i32_0 = arith.constant 0 : i32
    return %arg0, %c0_i32 : i32, i32
  }
  func.func @transform_1(%arg0: i32) -> (i32, i32) {
    %c0_i32 = arith.constant 0 : i32
    %c0_i32_0 = arith.constant 0 : i32
    return %arg0, %c0_i32 : i32, i32
  }
}

</mosaic_0001>

<llo_original>
// kernel: tpu_custom_call.1
$region0: #{tpu_custom_call.1}
  #allocation0 [shape = 'u32[]', space=smem, size = 0x4, offset = 0x4, fixed_abs, tag = 'smem constant byte address 0x4 - core index']
  #allocation1 [shape = 'u32[144,128]{1,0:T(1,128)}', space=vmem, size = 0x12000, scoped, tag = 'internal scratch']
  %s0 = inlined_call_operand.hbm [shape: f32[16,128], index: 0, kind: input, shape index: {}]
  %s1 = inlined_call_operand.hbm [shape: f32[16,128], index: 1, kind: output, shape index: {}]
  %s2 = sld [smem:[#allocation0]]
  $region18: #{tpu_custom_call.1} parent=0
    _
  %s4 = ssub.s32 1, %s2
  %s5 = scalar_select 0, %s4, %s2
  $region1: #{tpu_custom_call.1} parent=0
    #allocation2 [shape = 'u8[8192]{0}', space=vmem, size = 0x2000, scoped, tag = 'input window, operand 0, single buffered']
    #allocation3 [shape = 's32[1]{0}', space=sflag, size = 0x4, scoped, tag = 'scoped memory for tpu_custom_call.1']
    #allocation4 [shape = 's32[1]{0}', space=sflag, size = 0x4, scoped, tag = 'scoped memory for tpu_custom_call.1']
    #allocation5 [shape = 'u8[8192]{0}', space=vmem, size = 0x2000, scoped, tag = 'output window, operand 0, single buffered']
    %6 = vsyncpa [#allocation3], 0
    %7 = vsyncpa [#allocation4], 0
    // Predicated region
    $region2: #{tpu_custom_call.1} parent=1 // pred_check
      _
    $region3: #{tpu_custom_call.1} parent=1 // pred_check_branch
      %9 = sbr.rel (0) target = $region5
    $region4: #{tpu_custom_call.1} parent=1 // pred_region
      %s11 = ssub.s32 256, 256
      %12 = vsyncadd [#allocation3], %s11
      %s13 = sshll.u32 [#allocation2], 4
      %s14 = int_to_ptr.vmem [resolvable:$true] %s13
      %19 = dma.hbm_to_vmem [thread:$0]  %s0, 256, %s14, [#allocation3], 128, 128, 8
    $region5: #{tpu_custom_call.1} parent=1 // pred_fallthru
      _
    // Predicated region
    $region6: #{tpu_custom_call.1} parent=1 // pred_check
      _
    $region7: #{tpu_custom_call.1} parent=1 // pred_check_branch
      %21 = sbr.rel (0) target = $region9
    $region8: #{tpu_custom_call.1} parent=1 // pred_region
      %22 = dma.done [#allocation3], 256
    $region9: #{tpu_custom_call.1} parent=1 // pred_fallthru
      _
    %v23 = vld [vmem:[#allocation2] sm:$0xff]
    %v24 = vld [vmem:[#allocation2 + $0x8] sm:$0xff]
    %v25 = vmul.f32 %v23, 0.5
    %v26 = vmul.f32 %v24, 0.5
    %v27 = vtanh.pop %v25
    %v28 = vtanh.pop %v26
    %v29 = vadd.f32 %v27, 1.0
    %v30 = vadd.f32 %v28, 1.0
    %v31 = vmul.f32 %v29, 0.5
    %v32 = vmul.f32 %v30, 0.5
    %v33 = vmul.f32 %v23, %v31
    %v34 = vmul.f32 %v24, %v32
    %35 = vst [vmem:[#allocation5] sm:$0xff] %v33
    %36 = vst [vmem:[#allocation5 + $0x8] sm:$0xff] %v34
    // Predicated region
    $region10: #{tpu_custom_call.1} parent=1 // pred_check
      _
    $region11: #{tpu_custom_call.1} parent=1 // pred_check_branch
      %38 = sbr.rel (0) target = $region13
    $region12: #{tpu_custom_call.1} parent=1 // pred_region
      %s40 = ssub.s32 256, 256
      %41 = vsyncadd [#allocation4], %s40
      %s42 = sshll.u32 [#allocation5], 4
      %s43 = int_to_ptr.vmem [resolvable:$true] %s42
      %48 = dma.vmem_to_hbm [thread:$0]  %s43, 256, %s1, [#allocation4], 128, 128, 8
    $region13: #{tpu_custom_call.1} parent=1 // pred_fallthru
      _
    // Predicated region
    $region14: #{tpu_custom_call.1} parent=1 // pred_check
      _
    $region15: #{tpu_custom_call.1} parent=1 // pred_check_branch
      %50 = sbr.rel (0) target = $region17
    $region16: #{tpu_custom_call.1} parent=1 // pred_region
      %51 = dma.done [#allocation4], 256
    $region17: #{tpu_custom_call.1} parent=1 // pred_fallthru
      _
    %52 = vsyncpa [#allocation3], 1
    %53 = vsyncpa [#allocation4], 1

</llo_original>
